<compile_context>
chip_gen: v7x
topology: tpu7x:2x2x1
jax: 0.10.0
libtpu: 0.0.40
codegen_flags: <defaults>
</compile_context>

<pallas_src>
import jax
import jax.numpy as jnp
from jax import lax
from jax.experimental import pallas as pl
from jax.experimental.pallas import tpu as pltpu


# --------------------------------------------------------------------------- #
# Plain-JAX stand-ins for the pretrained sub-modules (glue, not the hot path). #
# TODO(synk): pretrained_model internals (scene_encoder / scene_attention /    #
# script_encoder / prediction_1..5) are not given in the reference; they are   #
# realised here as deterministic bi-GRU encoders + additive attention pooling  #
# + Linear(U, 1) prediction heads, initialised in-script.                      #
# --------------------------------------------------------------------------- #
def _gru_scan(x_seq, h0, Wi, Wh, bi, bh, reverse=False):
    # x_seq: (T, B, E), h0: (B, H) -> outputs (T, B, H)
    def step(h, x):
        gi = x @ Wi + bi
        gh = h @ Wh + bh
        i_r, i_z, i_n = jnp.split(gi, 3, axis=-1)
        h_r, h_z, h_n = jnp.split(gh, 3, axis=-1)
        r = jax.nn.sigmoid(i_r + h_r)
        z = jax.nn.sigmoid(i_z + h_z)
        n = jnp.tanh(i_n + r * h_n)
        h_new = (1.0 - z) * n + z * h
        return h_new, h_new

    _, outs = lax.scan(step, h0, x_seq, reverse=reverse)
    return outs


def bi_gru(x, p):
    # x: (B, T, E) -> (B, T, 2H)
    x_t = jnp.swapaxes(x, 0, 1)
    B = x.shape[0]
    H = p["Wh_f"].shape[0]
    h0 = jnp.zeros((B, H), jnp.float32)
    fwd = _gru_scan(x_t, h0, p["Wi_f"], p["Wh_f"], p["bi_f"], p["bh_f"], reverse=False)
    bwd = _gru_scan(x_t, h0, p["Wi_b"], p["Wh_b"], p["bi_b"], p["bh_b"], reverse=True)
    return jnp.swapaxes(jnp.concatenate([fwd, bwd], axis=-1), 0, 1)


def scene_attention(outs, scene_lens, p):
    # outs: (N, S, F) -> pooled (N, F), attention weights (N, S)
    scores = jnp.tanh(outs @ p["Wa"]) @ p["va"]                # (N, S)
    pos = jnp.arange(outs.shape[1])[None, :]
    mask = pos < scene_lens[:, None]
    scores = jnp.where(mask, scores, -1e9)
    w = jax.nn.softmax(scores, axis=-1)
    emb = jnp.einsum("ns,nsf->nf", w, outs)
    return emb, w


def context_matrices(num_scenes, window_length):
    """Averaging matrices so that left = L @ script_emb, right = R @ script_emb."""
    n = num_scenes
    w = int(window_length * n)
    assert w >= 1, "window_length * num_scenes must be >= 1"
    L = [[0.0] * n for _ in range(n)]
    R = [[0.0] * n for _ in range(n)]
    for i in range(n):
        # left context: mean over preceding window, excludes scene i
        if i == 0:
            pass
        elif i < w:
            for k in range(0, i):
                L[i][k] = 1.0 / i
        else:
            for k in range(i - w, i):
                L[i][k] = 1.0 / w
        # right context: mean over following window, includes scene i
        if i == n - 1:
            pass
        elif i > n - 1 - w:
            for k in range(i, n):
                R[i][k] = 1.0 / (n - i)
        else:
            for k in range(i, i + w):
                R[i][k] = 1.0 / w
    return jnp.asarray(L, jnp.float32), jnp.asarray(R, jnp.float32)


def _round_up(x, m):
    return ((x + m - 1) // m) * m


# --------------------------------------------------------------------------- #
# Pallas TPU kernel: the module's own compute.                                 #
# --------------------------------------------------------------------------- #
def summer_kernel(hp_ref, scene_ref, script_ref, lr_ref, w_ref, cosw_ref, b_ref,
                  y_ref):
    inv_temp = hp_ref[0]      # 1 / temperature
    beta = hp_ref[1]
    lam1 = hp_ref[2]

    S = script_ref[...]                        # (N, Dp) f32 script (TP) embeddings
    X = scene_ref[...]                         # (N, Ep) f32 raw scene embeddings
    N = S.shape[0]
    Dp = S.shape[1]
    n_out = y_ref.shape[1]

    # ---- rolling-window left / right context: ONE bf16 MXU matmul (f32 acc).
    S_bf = S.astype(jnp.bfloat16)
    ctx = jnp.dot(lr_ref[...], S_bf, preferred_element_type=jnp.float32)  # (2N, Dp)
    left = ctx[:N]
    right = ctx[N:]

    # ---- interaction features (only the pieces that cannot be folded into W).
    prod_l = S * left
    prod_r = S * right
    # rsqrt * mul instead of sqrt + divide (EUP slot; matches F.cosine_similarity
    # with per-vector norm clamped at 1e-8).
    s_inv = lax.rsqrt(jnp.maximum(jnp.sum(S * S, axis=-1, keepdims=True), 1e-16))
    l_inv = lax.rsqrt(jnp.maximum(jnp.sum(left * left, axis=-1, keepdims=True), 1e-16))
    r_inv = lax.rsqrt(jnp.maximum(jnp.sum(right * right, axis=-1, keepdims=True), 1e-16))
    cos_l = jnp.sum(prod_l, axis=-1, keepdims=True) * s_inv * l_inv       # (N, 1)
    cos_r = jnp.sum(prod_r, axis=-1, keepdims=True) * s_inv * r_inv       # (N, 1)

    # ---- five attention heads: energies as a sum of lane-aligned per-block
    #      matmuls (W_att split host-side; `diff` blocks folded into W_s/W_l/W_r).
    def head_mm(a_f32, k):
        w_blk = w_ref[k * Dp:(k + 1) * Dp, :]                              # (Dp, 5) bf16
        return jnp.dot(a_f32.astype(jnp.bfloat16), w_blk,
                       preferred_element_type=jnp.float32)

    energies = (jnp.dot(S_bf, w_ref[0:Dp, :], preferred_element_type=jnp.float32)
                + head_mm(left, 1)
                + head_mm(right, 2)
                + head_mm(prod_l, 3)
                + head_mm(prod_r, 4)
                + cos_l * cosw_ref[0:1, :]
                + cos_r * cosw_ref[1:2, :]
                + b_ref[...])                                              # (N, 5)

    # softmax over scenes per head, then epsilon + max over heads.
    e = energies * inv_temp
    e = e - jnp.max(e, axis=0, keepdims=True)
    p = jnp.exp(e)
    denom = jnp.sum(p, axis=0, keepdims=True)
    p = p * pl.reciprocal(denom, approx=True)
    att = jnp.max(p + 1e-11, axis=1, keepdims=True)                        # (N, 1)

    # ---- cosine-similarity graph on raw scene embeddings.
    # Kept f32 so the thresholded edge set is exact (diagonal stays zero).
    x_inv = lax.rsqrt(jnp.maximum(jnp.sum(X * X, axis=-1, keepdims=True), 1e-16))
    Xn = X * x_inv
    sim = lax.dot_general(Xn, Xn, (((1,), (1,)), ((), ())),
                          preferred_element_type=jnp.float32)              # (N, N)
    row = lax.broadcasted_iota(jnp.int32, (N, N), 0)
    col = lax.broadcasted_iota(jnp.int32, (N, N), 1)
    sim = jnp.where(row == col, 0.0, sim)

    mn = jnp.min(sim)
    mx = jnp.max(sim)
    thr = mn + beta * (mx - mn)

    edge_mask = jnp.logical_and(sim > thr, col > row)                      # i < j edges
    contrib = jnp.where(edge_mask, sim + att, 0.0)                         # sim[i,j] + att[i]
    forward_scores = jnp.sum(contrib, axis=0)                              # indexed by j
    backward_scores = jnp.sum(contrib, axis=1)                             # indexed by i

    y = lam1 * forward_scores + (1.0 - lam1) * backward_scores             # (N,)

    # lane-dense store (output padded to a multiple of 128 lanes).
    y_row = y[None, :]
    pad = n_out - N
    if pad > 0:
        y_row = jnp.concatenate([y_row, jnp.zeros((1, pad), jnp.float32)], axis=1)
    y_ref[...] = y_row


def summer_scores(scene_emb, script_emb, L, R, W_att, b_att, *,
                  temperature, beta, lambda1):
    N, E = scene_emb.shape
    _, D = script_emb.shape
    E_pad = _round_up(E, 128)
    D_pad = _round_up(D, 128)
    N_out = _round_up(N, 128)

    # zero-pad feature dims to full 128-lane vregs (zeros do not change dots,
    # norms or elementwise features).
    scene_p = jnp.pad(scene_emb.astype(jnp.float32), ((0, 0), (0, E_pad - E)))
    script_p = jnp.pad(script_emb.astype(jnp.float32), ((0, 0), (0, D_pad - D)))

    # ---- split W_att (9D+2, 5) into per-block weights and fold the diff blocks:
    # u = [S, S, left, S*left, left-S, cos_l, S, right, S*right, right-S, cos_r]
    W = W_att.astype(jnp.float32)
    W0 = W[0 * D:1 * D]
    W1 = W[1 * D:2 * D]
    W2 = W[2 * D:3 * D]
    W3 = W[3 * D:4 * D]
    W4 = W[4 * D:5 * D]
    w_cos_l = W[5 * D:5 * D + 1]
    off = 5 * D + 1
    W6 = W[off + 0 * D:off + 1 * D]
    W7 = W[off + 1 * D:off + 2 * D]
    W8 = W[off + 2 * D:off + 3 * D]
    W9 = W[off + 3 * D:off + 4 * D]
    w_cos_r = W[off + 4 * D:off + 4 * D + 1]

    W_s = W0 + W1 + W6 - W4 - W9       # multiplies script embeddings
    W_l = W2 + W4                      # multiplies left context
    W_r = W7 + W9                      # multiplies right context
    W_pl = W3                          # multiplies script * left
    W_pr = W8                          # multiplies script * right
    W_stack = jnp.stack([W_s, W_l, W_r, W_pl, W_pr], axis=0)               # (5, D, 5)
    W_stack = jnp.pad(W_stack, ((0, 0), (0, D_pad - D), (0, 0)))
    W_stack = W_stack.reshape(5 * D_pad, 5).astype(jnp.bfloat16)           # bf16 MXU input

    cos_w = jnp.concatenate([w_cos_l, w_cos_r], axis=0).astype(jnp.float32)  # (2, 5)
    b = b_att.reshape(1, 5).astype(jnp.float32)

    # L and R stacked into one operand -> single context matmul in the kernel.
    LR = jnp.concatenate([L, R], axis=0).astype(jnp.bfloat16)              # (2N, N)

    # hyperparameters via SMEM: no recompile when they change.
    hp = jnp.array([1.0 / float(temperature), float(beta), float(lambda1)],
                   jnp.float32)

    full = lambda a: pl.BlockSpec(a.shape, lambda i: (0,) * a.ndim)
    y = pl.pallas_call(
        summer_kernel,
        out_shape=jax.ShapeDtypeStruct((1, N_out), jnp.float32),
        grid=(1,),
        in_specs=[
            pl.BlockSpec(memory_space=pltpu.MemorySpace.SMEM),   # hp scalars
            full(scene_p), full(script_p), full(LR),
            full(W_stack), full(cos_w), full(b),
        ],
        out_specs=pl.BlockSpec((1, N_out), lambda i: (0, 0)),
        compiler_params=pltpu.CompilerParams(
            dimension_semantics=("arbitrary",)),
    )(hp, scene_p, script_p, LR, W_stack, cos_w, b)
    return y[0, :N]


# --------------------------------------------------------------------------- #
# Full forward (encoders in plain JAX, scoring in the Pallas kernel).          #
# --------------------------------------------------------------------------- #
def summer_unsupervised_forward(params, script, scene_lens, *, window_length,
                                lambda_1, beta, compression_rate, temperature):
    scene_embeddings = jnp.mean(script, axis=1)                       # (N, E)
    script_outs = bi_gru(script, params["scene_enc"])                 # (N, S, 2Hs)
    scene_emb_tp, _sa = scene_attention(script_outs, scene_lens, params["scene_att"])
    script_outs2 = bi_gru(scene_emb_tp[None, :, :], params["script_enc"])
    script_embeddings = script_outs2[0]                               # (N, D)

    N = script_embeddings.shape[0]
    L, R = context_matrices(N, window_length)
    y = summer_scores(scene_embeddings, script_embeddings, L, R,
                      params["W_att"], params["b_att"],
                      temperature=temperature, beta=beta,
                      lambda1=lambda_1 / 10.0)
    k = int(compression_rate * N)
    extracted = jnp.argsort(-y)[:k]
    return y, extracted


def _init_gru(key, in_dim, hidden, scale=0.1):
    ks = jax.random.split(key, 8)
    return {
        "Wi_f": scale * jax.random.normal(ks[0], (in_dim, 3 * hidden), jnp.float32),
        "Wh_f": scale * jax.random.normal(ks[1], (hidden, 3 * hidden), jnp.float32),
        "bi_f": scale * jax.random.normal(ks[2], (3 * hidden,), jnp.float32),
        "bh_f": scale * jax.random.normal(ks[3], (3 * hidden,), jnp.float32),
        "Wi_b": scale * jax.random.normal(ks[4], (in_dim, 3 * hidden), jnp.float32),
        "Wh_b": scale * jax.random.normal(ks[5], (hidden, 3 * hidden), jnp.float32),
        "bi_b": scale * jax.random.normal(ks[6], (3 * hidden,), jnp.float32),
        "bh_b": scale * jax.random.normal(ks[7], (3 * hidden,), jnp.float32),
    }


def init_params(key, emb_dim, scene_hidden, script_hidden, attn_dim=16, scale=0.1):
    k1, k2, k3, k4, k5, k6, k7 = jax.random.split(key, 7)
    scene_size = 2 * scene_hidden        # bidirectional
    script_size = 2 * script_hidden      # bidirectional
    u_dim = 9 * script_size + 2
    return {
        "scene_enc": _init_gru(k1, emb_dim, scene_hidden, scale),
        "scene_att": {
            "Wa": scale * jax.random.normal(k2, (scene_size, attn_dim), jnp.float32),
            "va": scale * jax.random.normal(k3, (attn_dim,), jnp.float32),
        },
        "script_enc": _init_gru(k4, scene_size, script_hidden, scale),
        "W_att": scale * jax.random.normal(k5, (u_dim, 5), jnp.float32),
        "b_att": scale * jax.random.normal(k6, (1, 5), jnp.float32),
    }


if __name__ == "__main__":
    key = jax.random.PRNGKey(0)
    N, S, E = 16, 8, 32          # scenes, sentences per scene, sentence-emb dim
    Hs, Hp = 16, 16              # scene / script encoder hidden (bi -> 32 each)

    k_data, k_par = jax.random.split(key)
    script = jax.random.normal(k_data, (N, S, E), jnp.float32)
    scene_lens = (jnp.arange(N) % S) + 1          # real sentence counts per scene

    params = init_params(k_par, E, Hs, Hp)

    y, extracted = summer_unsupervised_forward(
        params, script, scene_lens,
        window_length=0.25, lambda_1=7.0, beta=0.5,
        compression_rate=0.3, temperature=1.0)

    jax.block_until_ready(y)
    jax.block_until_ready(extracted)
    assert y.shape == (N,)
    print("KERNEL_OK")
</pallas_src>

<mosaic_0001>
module attributes {stable_mosaic.version = 11 : i64} {
  func.func @summer_kernel(%arg0: i32, %arg1: memref<3xf32, #tpu.memory_space<smem>>, %arg2: memref<16x128xf32, #tpu.memory_space<vmem>>, %arg3: memref<16x128xf32, #tpu.memory_space<vmem>>, %arg4: memref<32x16xbf16, #tpu.memory_space<vmem>>, %arg5: memref<640x5xbf16, #tpu.memory_space<vmem>>, %arg6: memref<2x5xf32, #tpu.memory_space<vmem>>, %arg7: memref<1x5xf32, #tpu.memory_space<vmem>>, %arg8: memref<1x128xf32, #tpu.memory_space<vmem>>) attributes {dimension_semantics = [#tpu.dimension_semantics<arbitrary>], iteration_bounds = array<i64: 1>, scalar_prefetch = 0 : i64, scratch_operands = 0 : i64, tpu.core_type = #tpu.core_type<tc>, window_params = [{transform_indices = @transform_0, window_bounds = array<i64: 3>}, {pipeline_mode = #tpu.pipeline_mode<synchronous>, transform_indices = @transform_1, window_bounds = array<i64: 16, 128>}, {pipeline_mode = #tpu.pipeline_mode<synchronous>, transform_indices = @transform_2, window_bounds = array<i64: 16, 128>}, {pipeline_mode = #tpu.pipeline_mode<synchronous>, transform_indices = @transform_3, window_bounds = array<i64: 32, 16>}, {pipeline_mode = #tpu.pipeline_mode<synchronous>, transform_indices = @transform_4, window_bounds = array<i64: 640, 5>}, {pipeline_mode = #tpu.pipeline_mode<synchronous>, transform_indices = @transform_5, window_bounds = array<i64: 2, 5>}, {pipeline_mode = #tpu.pipeline_mode<synchronous>, transform_indices = @transform_6, window_bounds = array<i64: 1, 5>}, {pipeline_mode = #tpu.pipeline_mode<synchronous>, transform_indices = @transform_7, window_bounds = array<i64: 1, 128>}]} {
    %c0 = arith.constant 0 : index
    %0 = memref.load %arg1[%c0] : memref<3xf32, #tpu.memory_space<smem>>
    %c1 = arith.constant 1 : index
    %1 = memref.load %arg1[%c1] : memref<3xf32, #tpu.memory_space<smem>>
    %c2 = arith.constant 2 : index
    %2 = memref.load %arg1[%c2] : memref<3xf32, #tpu.memory_space<smem>>
    %c0_0 = arith.constant 0 : index
    %c0_1 = arith.constant 0 : index
    %3 = vector.load %arg3[%c0_0, %c0_1] : memref<16x128xf32, #tpu.memory_space<vmem>>, vector<16x128xf32>
    %c0_2 = arith.constant 0 : index
    %c0_3 = arith.constant 0 : index
    %4 = vector.load %arg2[%c0_2, %c0_3] : memref<16x128xf32, #tpu.memory_space<vmem>>, vector<16x128xf32>
    %5 = arith.truncf %3 : vector<16x128xf32> to vector<16x128xbf16>
    %c0_4 = arith.constant 0 : index
    %c0_5 = arith.constant 0 : index
    %6 = vector.load %arg4[%c0_4, %c0_5] : memref<32x16xbf16, #tpu.memory_space<vmem>>, vector<32x16xbf16>
    %cst = arith.constant dense<0.000000e+00> : vector<32x128xf32>
    %7 = tpu.matmul %6, %5, %cst {dimension_numbers = #tpu.dot_dimension_numbers<[1], [0], [0], [1], [0, 0, 1, 1], [], []>} : vector<32x16xbf16>, vector<16x128xbf16>, vector<32x128xf32> -> vector<32x128xf32>
    %8 = vector.extract_strided_slice %7 {offsets = [0, 0], sizes = [16, 128], strides = [1, 1]} : vector<32x128xf32> to vector<16x128xf32>
    %9 = vector.extract_strided_slice %7 {offsets = [16, 0], sizes = [16, 128], strides = [1, 1]} : vector<32x128xf32> to vector<16x128xf32>
    %10 = arith.mulf %3, %8 : vector<16x128xf32>
    %11 = arith.mulf %3, %9 : vector<16x128xf32>
    %12 = arith.mulf %3, %3 : vector<16x128xf32>
    %cst_6 = arith.constant dense<0.000000e+00> : vector<16xf32>
    %13 = vector.multi_reduction <add>, %12, %cst_6 [1] : vector<16x128xf32> to vector<16xf32>
    %14 = vector.shape_cast %13 : vector<16xf32> to vector<16x1xf32>
    %cst_7 = arith.constant 1.000000e-16 : f32
    %15 = vector.broadcast %cst_7 : f32 to vector<16x1xf32>
    %16 = arith.maximumf %14, %15 : vector<16x1xf32>
    %17 = math.rsqrt %16 : vector<16x1xf32>
    %18 = arith.mulf %8, %8 : vector<16x128xf32>
    %cst_8 = arith.constant dense<0.000000e+00> : vector<16xf32>
    %19 = vector.multi_reduction <add>, %18, %cst_8 [1] : vector<16x128xf32> to vector<16xf32>
    %20 = vector.shape_cast %19 : vector<16xf32> to vector<16x1xf32>
    %cst_9 = arith.constant 1.000000e-16 : f32
    %21 = vector.broadcast %cst_9 : f32 to vector<16x1xf32>
    %22 = arith.maximumf %20, %21 : vector<16x1xf32>
    %23 = math.rsqrt %22 : vector<16x1xf32>
    %24 = arith.mulf %9, %9 : vector<16x128xf32>
    %cst_10 = arith.constant dense<0.000000e+00> : vector<16xf32>
    %25 = vector.multi_reduction <add>, %24, %cst_10 [1] : vector<16x128xf32> to vector<16xf32>
    %26 = vector.shape_cast %25 : vector<16xf32> to vector<16x1xf32>
    %cst_11 = arith.constant 1.000000e-16 : f32
    %27 = vector.broadcast %cst_11 : f32 to vector<16x1xf32>
    %28 = arith.maximumf %26, %27 : vector<16x1xf32>
    %29 = math.rsqrt %28 : vector<16x1xf32>
    %cst_12 = arith.constant dense<0.000000e+00> : vector<16xf32>
    %30 = vector.multi_reduction <add>, %10, %cst_12 [1] : vector<16x128xf32> to vector<16xf32>
    %31 = vector.shape_cast %30 : vector<16xf32> to vector<16x1xf32>
    %32 = arith.mulf %31, %17 : vector<16x1xf32>
    %33 = arith.mulf %32, %23 : vector<16x1xf32>
    %cst_13 = arith.constant dense<0.000000e+00> : vector<16xf32>
    %34 = vector.multi_reduction <add>, %11, %cst_13 [1] : vector<16x128xf32> to vector<16xf32>
    %35 = vector.shape_cast %34 : vector<16xf32> to vector<16x1xf32>
    %36 = arith.mulf %35, %17 : vector<16x1xf32>
    %37 = arith.mulf %36, %29 : vector<16x1xf32>
    %c0_14 = arith.constant 0 : index
    %c0_15 = arith.constant 0 : index
    %38 = vector.load %arg5[%c0_14, %c0_15] : memref<640x5xbf16, #tpu.memory_space<vmem>>, vector<128x5xbf16>
    %cst_16 = arith.constant dense<0.000000e+00> : vector<16x5xf32>
    %39 = tpu.matmul %5, %38, %cst_16 {dimension_numbers = #tpu.dot_dimension_numbers<[1], [0], [0], [1], [0, 0, 1, 1], [], []>} : vector<16x128xbf16>, vector<128x5xbf16>, vector<16x5xf32> -> vector<16x5xf32>
    %c128 = arith.constant 128 : index
    %c0_17 = arith.constant 0 : index
    %40 = vector.load %arg5[%c128, %c0_17] : memref<640x5xbf16, #tpu.memory_space<vmem>>, vector<128x5xbf16>
    %41 = arith.truncf %8 : vector<16x128xf32> to vector<16x128xbf16>
    %cst_18 = arith.constant dense<0.000000e+00> : vector<16x5xf32>
    %42 = tpu.matmul %41, %40, %cst_18 {dimension_numbers = #tpu.dot_dimension_numbers<[1], [0], [0], [1], [0, 0, 1, 1], [], []>} : vector<16x128xbf16>, vector<128x5xbf16>, vector<16x5xf32> -> vector<16x5xf32>
    %43 = arith.addf %39, %42 : vector<16x5xf32>
    %c256 = arith.constant 256 : index
    %c0_19 = arith.constant 0 : index
    %44 = vector.load %arg5[%c256, %c0_19] : memref<640x5xbf16, #tpu.memory_space<vmem>>, vector<128x5xbf16>
    %45 = arith.truncf %9 : vector<16x128xf32> to vector<16x128xbf16>
    %cst_20 = arith.constant dense<0.000000e+00> : vector<16x5xf32>
    %46 = tpu.matmul %45, %44, %cst_20 {dimension_numbers = #tpu.dot_dimension_numbers<[1], [0], [0], [1], [0, 0, 1, 1], [], []>} : vector<16x128xbf16>, vector<128x5xbf16>, vector<16x5xf32> -> vector<16x5xf32>
    %47 = arith.addf %43, %46 : vector<16x5xf32>
    %c384 = arith.constant 384 : index
    %c0_21 = arith.constant 0 : index
    %48 = vector.load %arg5[%c384, %c0_21] : memref<640x5xbf16, #tpu.memory_space<vmem>>, vector<128x5xbf16>
    %49 = arith.truncf %10 : vector<16x128xf32> to vector<16x128xbf16>
    %cst_22 = arith.constant dense<0.000000e+00> : vector<16x5xf32>
    %50 = tpu.matmul %49, %48, %cst_22 {dimension_numbers = #tpu.dot_dimension_numbers<[1], [0], [0], [1], [0, 0, 1, 1], [], []>} : vector<16x128xbf16>, vector<128x5xbf16>, vector<16x5xf32> -> vector<16x5xf32>
    %51 = arith.addf %47, %50 : vector<16x5xf32>
    %c512 = arith.constant 512 : index
    %c0_23 = arith.constant 0 : index
    %52 = vector.load %arg5[%c512, %c0_23] : memref<640x5xbf16, #tpu.memory_space<vmem>>, vector<128x5xbf16>
    %53 = arith.truncf %11 : vector<16x128xf32> to vector<16x128xbf16>
    %cst_24 = arith.constant dense<0.000000e+00> : vector<16x5xf32>
    %54 = tpu.matmul %53, %52, %cst_24 {dimension_numbers = #tpu.dot_dimension_numbers<[1], [0], [0], [1], [0, 0, 1, 1], [], []>} : vector<16x128xbf16>, vector<128x5xbf16>, vector<16x5xf32> -> vector<16x5xf32>
    %55 = arith.addf %51, %54 : vector<16x5xf32>
    %c0_25 = arith.constant 0 : index
    %c0_26 = arith.constant 0 : index
    %56 = vector.load %arg6[%c0_25, %c0_26] : memref<2x5xf32, #tpu.memory_space<vmem>>, vector<1x5xf32>
    %57 = vector.broadcast %33 : vector<16x1xf32> to vector<16x5xf32>
    %58 = vector.broadcast %56 : vector<1x5xf32> to vector<16x5xf32>
    %59 = arith.mulf %57, %58 : vector<16x5xf32>
    %60 = arith.addf %55, %59 : vector<16x5xf32>
    %c1_27 = arith.constant 1 : index
    %c0_28 = arith.constant 0 : index
    %61 = vector.load %arg6[%c1_27, %c0_28] : memref<2x5xf32, #tpu.memory_space<vmem>>, vector<1x5xf32>
    %62 = vector.broadcast %37 : vector<16x1xf32> to vector<16x5xf32>
    %63 = vector.broadcast %61 : vector<1x5xf32> to vector<16x5xf32>
    %64 = arith.mulf %62, %63 : vector<16x5xf32>
    %65 = arith.addf %60, %64 : vector<16x5xf32>
    %c0_29 = arith.constant 0 : index
    %c0_30 = arith.constant 0 : index
    %66 = vector.load %arg7[%c0_29, %c0_30] : memref<1x5xf32, #tpu.memory_space<vmem>>, vector<1x5xf32>
    %67 = vector.broadcast %66 : vector<1x5xf32> to vector<16x5xf32>
    %68 = arith.addf %65, %67 : vector<16x5xf32>
    %69 = vector.broadcast %0 : f32 to vector<16x5xf32>
    %70 = arith.mulf %68, %69 : vector<16x5xf32>
    %cst_31 = arith.constant dense<0xFF800000> : vector<5xf32>
    %71 = vector.multi_reduction <maximumf>, %70, %cst_31 [0] : vector<16x5xf32> to vector<5xf32>
    %72 = vector.shape_cast %71 : vector<5xf32> to vector<1x5xf32>
    %73 = vector.broadcast %72 : vector<1x5xf32> to vector<16x5xf32>
    %74 = arith.subf %70, %73 : vector<16x5xf32>
    %75 = math.exp %74 : vector<16x5xf32>
    %cst_32 = arith.constant dense<0.000000e+00> : vector<5xf32>
    %76 = vector.multi_reduction <add>, %75, %cst_32 [0] : vector<16x5xf32> to vector<5xf32>
    %77 = vector.shape_cast %76 : vector<5xf32> to vector<1x5xf32>
    %78 = tpu.reciprocal %77 {approx = true} : vector<1x5xf32> -> vector<1x5xf32>
    %79 = vector.broadcast %78 : vector<1x5xf32> to vector<16x5xf32>
    %80 = arith.mulf %75, %79 : vector<16x5xf32>
    %cst_33 = arith.constant 9.99999996E-12 : f32
    %81 = vector.broadcast %cst_33 : f32 to vector<16x5xf32>
    %82 = arith.addf %80, %81 : vector<16x5xf32>
    %cst_34 = arith.constant dense<0xFF800000> : vector<16xf32>
    %83 = vector.multi_reduction <maximumf>, %82, %cst_34 [1] : vector<16x5xf32> to vector<16xf32>
    %84 = vector.shape_cast %83 : vector<16xf32> to vector<16x1xf32>
    %85 = arith.mulf %4, %4 : vector<16x128xf32>
    %cst_35 = arith.constant dense<0.000000e+00> : vector<16xf32>
    %86 = vector.multi_reduction <add>, %85, %cst_35 [1] : vector<16x128xf32> to vector<16xf32>
    %87 = vector.shape_cast %86 : vector<16xf32> to vector<16x1xf32>
    %cst_36 = arith.constant 1.000000e-16 : f32
    %88 = vector.broadcast %cst_36 : f32 to vector<16x1xf32>
    %89 = arith.maximumf %87, %88 : vector<16x1xf32>
    %90 = math.rsqrt %89 : vector<16x1xf32>
    %91 = vector.broadcast %90 : vector<16x1xf32> to vector<16x128xf32>
    %92 = arith.mulf %4, %91 : vector<16x128xf32>
    %cst_37 = arith.constant dense<0.000000e+00> : vector<16x16xf32>
    %93 = tpu.matmul %92, %92, %cst_37 {dimension_numbers = #tpu.dot_dimension_numbers<[1], [1], [0], [0], [0, 0, 1, 0], [], []>} : vector<16x128xf32>, vector<16x128xf32>, vector<16x16xf32> -> vector<16x16xf32>
    %94 = tpu.iota {dimensions = array<i32: 0>} : vector<16x16xi32>
    %95 = tpu.iota {dimensions = array<i32: 1>} : vector<16x16xi32>
    %96 = arith.cmpi eq, %94, %95 : vector<16x16xi32>
    %cst_38 = arith.constant 0.000000e+00 : f32
    %97 = vector.broadcast %cst_38 : f32 to vector<16x16xf32>
    %98 = arith.select %96, %97, %93 : vector<16x16xi1>, vector<16x16xf32>
    %99 = vector.shape_cast %98 : vector<16x16xf32> to vector<1x16x16xf32>
    %cst_39 = arith.constant dense<0x7F800000> : vector<1xf32>
    %100 = vector.multi_reduction <minimumf>, %99, %cst_39 [1, 2] : vector<1x16x16xf32> to vector<1xf32>
    %101 = vector.shape_cast %100 : vector<1xf32> to vector<1x1x1xf32>
    %102 = vector.extract %101[0, 0, 0] : f32 from vector<1x1x1xf32>
    %103 = vector.shape_cast %98 : vector<16x16xf32> to vector<1x16x16xf32>
    %cst_40 = arith.constant dense<0xFF800000> : vector<1xf32>
    %104 = vector.multi_reduction <maximumf>, %103, %cst_40 [1, 2] : vector<1x16x16xf32> to vector<1xf32>
    %105 = vector.shape_cast %104 : vector<1xf32> to vector<1x1x1xf32>
    %106 = vector.extract %105[0, 0, 0] : f32 from vector<1x1x1xf32>
    %107 = arith.subf %106, %102 : f32
    %108 = arith.mulf %1, %107 : f32
    %109 = arith.addf %102, %108 : f32
    %110 = vector.broadcast %109 : f32 to vector<16x16xf32>
    %111 = arith.cmpf ogt, %98, %110 : vector<16x16xf32>
    %112 = arith.cmpi sgt, %95, %94 : vector<16x16xi32>
    %113 = arith.andi %111, %112 : vector<16x16xi1>
    %114 = vector.broadcast %84 : vector<16x1xf32> to vector<16x16xf32>
    %115 = arith.addf %98, %114 : vector<16x16xf32>
    %cst_41 = arith.constant 0.000000e+00 : f32
    %116 = vector.broadcast %cst_41 : f32 to vector<16x16xf32>
    %117 = arith.select %113, %115, %116 : vector<16x16xi1>, vector<16x16xf32>
    %cst_42 = arith.constant dense<0.000000e+00> : vector<16xf32>
    %118 = vector.multi_reduction <add>, %117, %cst_42 [0] : vector<16x16xf32> to vector<16xf32>
    %cst_43 = arith.constant dense<0.000000e+00> : vector<16xf32>
    %119 = vector.multi_reduction <add>, %117, %cst_43 [1] : vector<16x16xf32> to vector<16xf32>
    %120 = vector.broadcast %2 : f32 to vector<16xf32>
    %121 = arith.mulf %120, %118 : vector<16xf32>
    %cst_44 = arith.constant 1.000000e+00 : f32
    %122 = arith.subf %cst_44, %2 : f32
    %123 = vector.broadcast %122 : f32 to vector<16xf32>
    %124 = arith.mulf %123, %119 : vector<16xf32>
    %125 = arith.addf %121, %124 : vector<16xf32>
    %126 = vector.shape_cast %125 : vector<16xf32> to vector<1x16xf32>
    %cst_45 = arith.constant 0.000000e+00 : f32
    %127 = vector.broadcast %cst_45 : f32 to vector<1x112xf32>
    %128 = tpu.concatenate %126, %127 in 1 : vector<1x16xf32>, vector<1x112xf32> -> vector<1x128xf32>
    %c0_46 = arith.constant 0 : index
    %c0_47 = arith.constant 0 : index
    %129 = vector.load %arg8[%c0_46, %c0_47] : memref<1x128xf32, #tpu.memory_space<vmem>>, vector<1x128xf32>
    tpu.vector_store %arg8[%c0_46, %c0_47], %128 {strides = array<i32>} : memref<1x128xf32, #tpu.memory_space<vmem>>, vector<1x128xf32>,
    return
  }
  func.func @transform_0(%arg0: i32) -> i32 {
    %c0_i32 = arith.constant 0 : i32
    %c0_i32_0 = arith.constant 0 : i32
    return %c0_i32 : i32
  }
  func.func @transform_1(%arg0: i32) -> (i32, i32) {
    %c0_i32 = arith.constant 0 : i32
    %c0_i32_0 = arith.constant 0 : i32
    %c0_i32_1 = arith.constant 0 : i32
    return %c0_i32, %c0_i32_0 : i32, i32
  }
  func.func @transform_2(%arg0: i32) -> (i32, i32) {
    %c0_i32 = arith.constant 0 : i32
    %c0_i32_0 = arith.constant 0 : i32
    %c0_i32_1 = arith.constant 0 : i32
    return %c0_i32, %c0_i32_0 : i32, i32
  }
  func.func @transform_3(%arg0: i32) -> (i32, i32) {
    %c0_i32 = arith.constant 0 : i32
    %c0_i32_0 = arith.constant 0 : i32
    %c0_i32_1 = arith.constant 0 : i32
    return %c0_i32, %c0_i32_0 : i32, i32
  }
  func.func @transform_4(%arg0: i32) -> (i32, i32) {
    %c0_i32 = arith.constant 0 : i32
    %c0_i32_0 = arith.constant 0 : i32
    %c0_i32_1 = arith.constant 0 : i32
    return %c0_i32, %c0_i32_0 : i32, i32
  }
  func.func @transform_5(%arg0: i32) -> (i32, i32) {
    %c0_i32 = arith.constant 0 : i32
    %c0_i32_0 = arith.constant 0 : i32
    %c0_i32_1 = arith.constant 0 : i32
    return %c0_i32, %c0_i32_0 : i32, i32
  }
  func.func @transform_6(%arg0: i32) -> (i32, i32) {
    %c0_i32 = arith.constant 0 : i32
    %c0_i32_0 = arith.constant 0 : i32
    %c0_i32_1 = arith.constant 0 : i32
    return %c0_i32, %c0_i32_0 : i32, i32
  }
  func.func @transform_7(%arg0: i32) -> (i32, i32) {
    %c0_i32 = arith.constant 0 : i32
    %c0_i32_0 = arith.constant 0 : i32
    %c0_i32_1 = arith.constant 0 : i32
    return %c0_i32, %c0_i32_0 : i32, i32
  }
}

</mosaic_0001>

<llo_original>
// kernel: tpu_custom_call.1
$region0: #{tpu_custom_call.1}
  #allocation0 [shape = 'u32[]', space=smem, size = 0x4, offset = 0x4, fixed_abs, tag = 'smem constant byte address 0x4 - core index']
  #allocation1 [shape = 'u32[144,128]{1,0:T(1,128)}', space=vmem, size = 0x12000, scoped, tag = 'internal scratch']
  %s0 = inlined_call_operand.vmem [shape: f32[3], index: 0, kind: input, shape index: {}]
  %s1 = inlined_call_operand.vmem [shape: f32[16,128], index: 1, kind: input, shape index: {}]
  %s2 = inlined_call_operand.vmem [shape: f32[16,128], index: 2, kind: input, shape index: {}]
  %s3 = inlined_call_operand.vmem [shape: bf16[32,16], index: 3, kind: input, shape index: {}]
  %s4 = inlined_call_operand.vmem [shape: bf16[640,5], index: 4, kind: input, shape index: {}]
  %s5 = inlined_call_operand.vmem [shape: f32[2,5], index: 5, kind: input, shape index: {}]
  %s6 = inlined_call_operand.vmem [shape: f32[1,5], index: 6, kind: input, shape index: {}]
  %s7 = inlined_call_operand.hbm [shape: f32[1,128], index: 7, kind: output, shape index: {}]
  %s8 = sld [smem:[#allocation0]]
  $region42: #{tpu_custom_call.1} parent=0
    _
  %s10 = ssub.s32 1, %s8
  %s11 = scalar_select 0, %s10, %s8
  $region1: #{tpu_custom_call.1} parent=0
    #allocation2 [shape = 'u8[512]{0}', space=smem, size = 0x200, scoped, tag = 'input window, operand 0, single buffered']
    #allocation3 [shape = 's32[1]{0}', space=sflag, size = 0x4, scoped, tag = 'scoped memory for tpu_custom_call.1']
    #allocation4 [shape = 's32[1]{0}', space=sflag, size = 0x4, scoped, tag = 'scoped memory for tpu_custom_call.1']
    #allocation5 [shape = 'u8[512]{0}', space=vmem, size = 0x400, scoped, tag = 'output window, operand 0, single buffered']
    %12 = vsyncpa [#allocation4], 0
    %13 = vsyncpa [#allocation3], 0
    // Predicated region
    $region2: #{tpu_custom_call.1} parent=1 // pred_check
      _
    $region3: #{tpu_custom_call.1} parent=1 // pred_check_branch
      %15 = sbr.rel (0) target = $region5
    $region4: #{tpu_custom_call.1} parent=1 // pred_region
      %s17 = ssub.s32 16, 16
      %18 = vsyncadd [#allocation4], %s17
      %s20 = sshll.u32 %s0, 4
      %s21 = int_to_ptr.vmem [resolvable:$true] %s20
      %23 = dma.vmem_to_smem %s21, 16, [#allocation2], [#allocation4]
    $region5: #{tpu_custom_call.1} parent=1 // pred_fallthru
      _
    // Predicated region
    $region6: #{tpu_custom_call.1} parent=1 // pred_check
      _
    $region7: #{tpu_custom_call.1} parent=1 // pred_check_branch
      %25 = sbr.rel (0) target = $region9
    $region8: #{tpu_custom_call.1} parent=1 // pred_region
      _
    $region9: #{tpu_custom_call.1} parent=1 // pred_fallthru
      _
    // Predicated region
    $region10: #{tpu_custom_call.1} parent=1 // pred_check
      _
    $region11: #{tpu_custom_call.1} parent=1 // pred_check_branch
      %27 = sbr.rel (0) target = $region13
    $region12: #{tpu_custom_call.1} parent=1 // pred_region
      _
    $region13: #{tpu_custom_call.1} parent=1 // pred_fallthru
      _
    // Predicated region
    $region14: #{tpu_custom_call.1} parent=1 // pred_check
      _
    $region15: #{tpu_custom_call.1} parent=1 // pred_check_branch
      %29 = sbr.rel (0) target = $region17
    $region16: #{tpu_custom_call.1} parent=1 // pred_region
      _
    $region17: #{tpu_custom_call.1} parent=1 // pred_fallthru
      _
    // Predicated region
    $region18: #{tpu_custom_call.1} parent=1 // pred_check
      _
    $region19: #{tpu_custom_call.1} parent=1 // pred_check_branch
      %31 = sbr.rel (0) target = $region21
    $region20: #{tpu_custom_call.1} parent=1 // pred_region
      _
    $region21: #{tpu_custom_call.1} parent=1 // pred_fallthru
      _
    // Predicated region
    $region22: #{tpu_custom_call.1} parent=1 // pred_check
      _
    $region23: #{tpu_custom_call.1} parent=1 // pred_check_branch
      %33 = sbr.rel (0) target = $region25
    $region24: #{tpu_custom_call.1} parent=1 // pred_region
      _
    $region25: #{tpu_custom_call.1} parent=1 // pred_fallthru
      _
    // Predicated region
    $region26: #{tpu_custom_call.1} parent=1 // pred_check
      _
    $region27: #{tpu_custom_call.1} parent=1 // pred_check_branch
      %35 = sbr.rel (0) target = $region29
    $region28: #{tpu_custom_call.1} parent=1 // pred_region
      _
    $region29: #{tpu_custom_call.1} parent=1 // pred_fallthru
      _
    // Predicated region
    $region30: #{tpu_custom_call.1} parent=1 // pred_check
      _
    $region31: #{tpu_custom_call.1} parent=1 // pred_check_branch
      %37 = sbr.rel (0) target = $region33
    $region32: #{tpu_custom_call.1} parent=1 // pred_region
      %38 = dma.done [#allocation4], 16
    $region33: #{tpu_custom_call.1} parent=1 // pred_fallthru
      _
    %39 = sfence
    %s41 = sld [smem:[#allocation2]]
    %s42 = sld [smem:[#allocation2 + $0x1]]
    %s43 = sld [smem:[#allocation2 + $0x2]]
    %v44 = vld [vmem:[%s2] sm:$0xff]
    %v45 = vld [vmem:[%s2 + $0x8] sm:$0xff]
    %v46 = vld [vmem:[%s1] sm:$0xff]
    %v47 = vld [vmem:[%s1 + $0x8] sm:$0xff]
    %v48 = vpack.c.bf16 %v45, %v44
    %v49 = vld [vmem:[%s3] sm:$0xf]
    %v50 = vld [vmem:[%s3 + $0x4] sm:$0xf]
    %v51 = vld [vmem:[%s3 + $0x8] sm:$0xf]
    %v52 = vld [vmem:[%s3 + $0xc] sm:$0xf]
    %v57 = vunpack.c.l.b16 %v49
    %v58 = vunpack.c.l.b16 %v50
    %v59 = vunpack.c.l.b16 %v51
    %v60 = vunpack.c.l.b16 %v52
    %v61 = vpack.c.b16 %v58, %v57
    %v62 = vpack.c.b16 %v60, %v59
    %vm63 = vcmask 130048
    %v65 = vsel %vm63, %v61, 0
    %v68 = vsel %vm63, %v62, 0
    %70 = vmatprep.subr.bf16.mxu0 0
    %71 = vmatpush1.bf16.msra.mxu0 %v48
    %72 = vmatprep.subr.bf16.mxu0 0
    %73 = vmatpush1.bf16.msra.mxu0 0
    %74 = vmatprep.subr.bf16.mxu0 0
    %75 = vmatpush1.bf16.msra.mxu0 0
    %76 = vmatprep.subr.bf16.mxu0 0
    %77 = vmatpush1.bf16.msra.mxu0 0
    %78 = vmatprep.subr.bf16.mxu0 0
    %79 = vmatpush1.bf16.msra.mxu0 0
    %80 = vmatprep.subr.bf16.mxu0 0
    %81 = vmatpush1.bf16.msra.mxu0 0
    %82 = vmatprep.subr.bf16.mxu0 0
    %83 = vmatpush1.bf16.msra.mxu0 0
    %84 = vmatprep.subr.bf16.mxu0 0
    %85 = vmatpush1.bf16.msra.mxu0 0
    %86 = vmatprep.subr.bf16.mxu0 0
    %87 = vmatpush1.bf16.msra.mxu0 0
    %88 = vmatprep.subr.bf16.mxu0 0
    %89 = vmatpush1.bf16.msra.mxu0 0
    %90 = vmatprep.subr.bf16.mxu0 0
    %91 = vmatpush1.bf16.msra.mxu0 0
    %92 = vmatprep.subr.bf16.mxu0 0
    %93 = vmatpush1.bf16.msra.mxu0 0
    %94 = vmatprep.subr.bf16.mxu0 0
    %95 = vmatpush1.bf16.msra.mxu0 0
    %96 = vmatprep.subr.bf16.mxu0 0
    %97 = vmatpush1.bf16.msra.mxu0 0
    %98 = vmatprep.subr.bf16.mxu0 0
    %99 = vmatpush1.bf16.msra.mxu0 0
    %100 = vmatprep.subr.bf16.mxu0 0
    %101 = vmatpush1.bf16.msra.mxu0 0
    %102 = vmatprep.mubr.bf16.mxu0 0
    %103 = vmatmul.mubr.bf16.gmra.mrb[0].mxu0 %v65
    %v104 = vpop.f32.mrb[0].mxu0
    %v105 = vadd.f32 0.0, %v104
    %v106 = vpop.f32.mrb[0].mxu0
    %v107 = vpop.f32.mrb[0].mxu0
    %v108 = vadd.f32 0.0, %v107
    %v109 = vpop.f32.mrb[0].mxu0
    %110 = vmatprep.mubr.bf16.mxu0 0
    %111 = vmatmul.mubr.bf16.gmra.mrb[0].mxu0 %v68
    %v112 = vpop.f32.mrb[0].mxu0
    %v113 = vadd.f32 0.0, %v112
    %v114 = vpop.f32.mrb[0].mxu0
    %v115 = vpop.f32.mrb[0].mxu0
    %v116 = vadd.f32 0.0, %v115
    %v117 = vpop.f32.mrb[0].mxu0
    %118 = vdwg.mxu0
    %v119 = vmul.f32 %v44, %v105
    %v120 = vmul.f32 %v45, %v108
    %v121 = vmul.f32 %v44, %v113
    %v122 = vmul.f32 %v45, %v116
    %v123 = vmul.f32 %v44, %v44
    %v124 = vmul.f32 %v45, %v45
    %125 = vadd.xlane.f32.xlu0 %v123
    %v126 = vpop.xlane.xlu0 %125
    %127 = vadd.xlane.f32.xlu0 %v124
    %v128 = vpop.xlane.xlu0 %127
    %v129 = vmax.f32 %v126, 1e-16
    %v130 = vmax.f32 %v128, 1e-16
    %v131 = vrsqrt.pop %v129
    %v132 = vrsqrt.pop %v130
    %v133 = vmul.f32 %v105, %v105
    %v134 = vmul.f32 %v108, %v108
    %135 = vadd.xlane.f32.xlu0 %v133
    %v136 = vpop.xlane.xlu0 %135
    %137 = vadd.xlane.f32.xlu0 %v134
    %v138 = vpop.xlane.xlu0 %137
    %v139 = vmax.f32 %v136, 1e-16
    %v140 = vmax.f32 %v138, 1e-16
    %v141 = vrsqrt.pop %v139
    %v142 = vrsqrt.pop %v140
    %v143 = vmul.f32 %v113, %v113
    %v144 = vmul.f32 %v116, %v116
    %145 = vadd.xlane.f32.xlu0 %v143
    %v146 = vpop.xlane.xlu0 %145
    %147 = vadd.xlane.f32.xlu0 %v144
    %v148 = vpop.xlane.xlu0 %147
    %v149 = vmax.f32 %v146, 1e-16
    %v150 = vmax.f32 %v148, 1e-16
    %v151 = vrsqrt.pop %v149
    %v152 = vrsqrt.pop %v150
    %153 = vadd.xlane.f32.xlu0 %v119
    %v154 = vpop.xlane.xlu0 %153
    %155 = vadd.xlane.f32.xlu0 %v120
    %v156 = vpop.xlane.xlu0 %155
    %v157 = vmul.f32 %v154, %v131
    %v158 = vmul.f32 %v156, %v132
    %v159 = vmul.f32 %v157, %v141
    %v160 = vmul.f32 %v158, %v142
    %161 = vadd.xlane.f32.xlu0 %v121
    %v162 = vpop.xlane.xlu0 %161
    %163 = vadd.xlane.f32.xlu0 %v122
    %v164 = vpop.xlane.xlu0 %163
    %v165 = vmul.f32 %v162, %v131
    %v166 = vmul.f32 %v164, %v132
    %v167 = vmul.f32 %v165, %v151
    %v168 = vmul.f32 %v166, %v152
    %v169 = vld [vmem:[%s4] sm:$0xf]
    %v170 = vld [vmem:[%s4 + $0x4] sm:$0xf]
    %v171 = vld [vmem:[%s4 + $0x8] sm:$0xf]
    %v172 = vld [vmem:[%s4 + $0xc] sm:$0xf]
    %v173 = vld [vmem:[%s4 + $0x10] sm:$0xf]
    %v174 = vld [vmem:[%s4 + $0x14] sm:$0xf]
    %v175 = vld [vmem:[%s4 + $0x18] sm:$0xf]
    %v176 = vld [vmem:[%s4 + $0x1c] sm:$0xf]
    %v177 = vld [vmem:[%s4 + $0x20] sm:$0xf]
    %v178 = vld [vmem:[%s4 + $0x24] sm:$0xf]
    %v179 = vld [vmem:[%s4 + $0x28] sm:$0xf]
    %v180 = vld [vmem:[%s4 + $0x2c] sm:$0xf]
    %v181 = vld [vmem:[%s4 + $0x30] sm:$0xf]
    %v182 = vld [vmem:[%s4 + $0x34] sm:$0xf]
    %v183 = vld [vmem:[%s4 + $0x38] sm:$0xf]
    %v184 = vld [vmem:[%s4 + $0x3c] sm:$0xf]
    %v185 = vld [vmem:[%s4 + $0x40] sm:$0xf]
    %v186 = vld [vmem:[%s4 + $0x44] sm:$0xf]
    %v187 = vld [vmem:[%s4 + $0x48] sm:$0xf]
    %v188 = vld [vmem:[%s4 + $0x4c] sm:$0xf]
    %v189 = vld [vmem:[%s4 + $0x50] sm:$0xf]
    %v190 = vld [vmem:[%s4 + $0x54] sm:$0xf]
    %v191 = vld [vmem:[%s4 + $0x58] sm:$0xf]
    %v192 = vld [vmem:[%s4 + $0x5c] sm:$0xf]
    %v193 = vld [vmem:[%s4 + $0x60] sm:$0xf]
    %v194 = vld [vmem:[%s4 + $0x64] sm:$0xf]
    %v195 = vld [vmem:[%s4 + $0x68] sm:$0xf]
    %v196 = vld [vmem:[%s4 + $0x6c] sm:$0xf]
    %v197 = vld [vmem:[%s4 + $0x70] sm:$0xf]
    %v198 = vld [vmem:[%s4 + $0x74] sm:$0xf]
    %v199 = vld [vmem:[%s4 + $0x78] sm:$0xf]
    %v200 = vld [vmem:[%s4 + $0x7c] sm:$0xf]
    %v201 = vpack.c.bf16 %v108, %v105
    %v218 = vunpack.c.l.b16 %v185
    %v219 = vunpack.c.l.b16 %v186
    %v220 = vunpack.c.l.b16 %v187
    %v221 = vunpack.c.l.b16 %v188
    %v222 = vunpack.c.l.b16 %v189
    %v223 = vunpack.c.l.b16 %v190
    %v224 = vunpack.c.l.b16 %v191
    %v225 = vunpack.c.l.b16 %v192
    %v226 = vunpack.c.l.b16 %v193
    %v227 = vunpack.c.l.b16 %v194
    %v228 = vunpack.c.l.b16 %v195
    %v229 = vunpack.c.l.b16 %v196
    %v230 = vunpack.c.l.b16 %v197
    %v231 = vunpack.c.l.b16 %v198
    %v232 = vunpack.c.l.b16 %v199
    %v233 = vunpack.c.l.b16 %v200
    %v234 = vpack.c.b16 %v219, %v218
    %v235 = vpack.c.b16 %v221, %v220
    %v236 = vpack.c.b16 %v223, %v222
    %v237 = vpack.c.b16 %v225, %v224
    %v238 = vpack.c.b16 %v227, %v226
    %v239 = vpack.c.b16 %v229, %v228
    %v240 = vpack.c.b16 %v231, %v230
    %v241 = vpack.c.b16 %v233, %v232
    %250 = vmatprep.subr.bf16.mxu0 0
    %251 = vmatpush1.bf16.msra.mxu0 %v234
    %252 = vmatprep.subr.bf16.mxu0 0
    %253 = vmatpush1.bf16.msra.mxu0 %v235
    %254 = vmatprep.subr.bf16.mxu0 0
    %255 = vmatpush1.bf16.msra.mxu0 %v236
    %256 = vmatprep.subr.bf16.mxu0 0
    %257 = vmatpush1.bf16.msra.mxu0 %v237
    %258 = vmatprep.subr.bf16.mxu0 0
    %259 = vmatpush1.bf16.msra.mxu0 %v238
    %260 = vmatprep.subr.bf16.mxu0 0
    %261 = vmatpush1.bf16.msra.mxu0 %v239
    %262 = vmatprep.subr.bf16.mxu0 0
    %263 = vmatpush1.bf16.msra.mxu0 %v240
    %264 = vmatprep.subr.bf16.mxu0 0
    %265 = vmatpush1.bf16.msra.mxu0 %v241
    %266 = vmatprep.subr.bf16.mxu0 0
    %267 = vmatpush1.bf16.msra.mxu0 0
    %268 = vmatprep.subr.bf16.mxu0 0
    %269 = vmatpush1.bf16.msra.mxu0 0
    %270 = vmatprep.subr.bf16.mxu0 0
    %271 = vmatpush1.bf16.msra.mxu0 0
    %272 = vmatprep.subr.bf16.mxu0 0
    %273 = vmatpush1.bf16.msra.mxu0 0
    %274 = vmatprep.subr.bf16.mxu0 0
    %275 = vmatpush1.bf16.msra.mxu0 0
    %276 = vmatprep.subr.bf16.mxu0 0
    %277 = vmatpush1.bf16.msra.mxu0 0
    %278 = vmatprep.subr.bf16.mxu0 0
    %279 = vmatpush1.bf16.msra.mxu0 0
    %280 = vmatprep.subr.bf16.mxu0 0
    %281 = vmatpush1.bf16.msra.mxu0 0
    %282 = vmatprep.mubr.bf16.mxu0 0
    %283 = vmatmul.mubr.bf16.gmra.mrb[0].mxu0 %v201
    %v284 = vpop.f32.mrb[0].mxu0
    %v285 = vadd.f32 0.0, %v284
    %v286 = vpop.f32.mrb[0].mxu0
    %v287 = vpop.f32.mrb[0].mxu0
    %v288 = vadd.f32 0.0, %v287
    %v289 = vpop.f32.mrb[0].mxu0
    %290 = vdwg.mxu0
    %v307 = vunpack.c.l.b16 %v169
    %v308 = vunpack.c.l.b16 %v170
    %v309 = vunpack.c.l.b16 %v171
    %v310 = vunpack.c.l.b16 %v172
    %v311 = vunpack.c.l.b16 %v173
    %v312 = vunpack.c.l.b16 %v174
    %v313 = vunpack.c.l.b16 %v175
    %v314 = vunpack.c.l.b16 %v176
    %v315 = vunpack.c.l.b16 %v177
    %v316 = vunpack.c.l.b16 %v178
    %v317 = vunpack.c.l.b16 %v179
    %v318 = vunpack.c.l.b16 %v180
    %v319 = vunpack.c.l.b16 %v181
    %v320 = vunpack.c.l.b16 %v182
    %v321 = vunpack.c.l.b16 %v183
    %v322 = vunpack.c.l.b16 %v184
    %v323 = vpack.c.b16 %v308, %v307
    %v324 = vpack.c.b16 %v310, %v309
    %v325 = vpack.c.b16 %v312, %v311
    %v326 = vpack.c.b16 %v314, %v313
    %v327 = vpack.c.b16 %v316, %v315
    %v328 = vpack.c.b16 %v318, %v317
    %v329 = vpack.c.b16 %v320, %v319
    %v330 = vpack.c.b16 %v322, %v321
    %339 = vmatprep.subr.bf16.mxu0 0
    %340 = vmatpush1.bf16.msra.mxu0 %v323
    %341 = vmatprep.subr.bf16.mxu0 0
    %342 = vmatpush1.bf16.msra.mxu0 %v324
    %343 = vmatprep.subr.bf16.mxu0 0
    %344 = vmatpush1.bf16.msra.mxu0 %v325
    %345 = vmatprep.subr.bf16.mxu0 0
    %346 = vmatpush1.bf16.msra.mxu0 %v326
    %347 = vmatprep.subr.bf16.mxu0 0
    %348 = vmatpush1.bf16.msra.mxu0 %v327
    %349 = vmatprep.subr.bf16.mxu0 0
    %350 = vmatpush1.bf16.msra.mxu0 %v328
    %351 = vmatprep.subr.bf16.mxu0 0
    %352 = vmatpush1.bf16.msra.mxu0 %v329
    %353 = vmatprep.subr.bf16.mxu0 0
    %354 = vmatpush1.bf16.msra.mxu0 %v330
    %355 = vmatprep.subr.bf16.mxu0 0
    %356 = vmatpush1.bf16.msra.mxu0 0
    %357 = vmatprep.subr.bf16.mxu0 0
    %358 = vmatpush1.bf16.msra.mxu0 0
    %359 = vmatprep.subr.bf16.mxu0 0
    %360 = vmatpush1.bf16.msra.mxu0 0
    %361 = vmatprep.subr.bf16.mxu0 0
    %362 = vmatpush1.bf16.msra.mxu0 0
    %363 = vmatprep.subr.bf16.mxu0 0
    %364 = vmatpush1.bf16.msra.mxu0 0
    %365 = vmatprep.subr.bf16.mxu0 0
    %366 = vmatpush1.bf16.msra.mxu0 0
    %367 = vmatprep.subr.bf16.mxu0 0
    %368 = vmatpush1.bf16.msra.mxu0 0
    %369 = vmatprep.subr.bf16.mxu0 0
    %370 = vmatpush1.bf16.msra.mxu0 0
    %371 = vmatprep.mubr.bf16.mxu0 0
    %372 = vmatmul.mubr.bf16.gmra.mrb[0].mxu0 %v48
    %v373 = vpop.f32.mrb[0].mxu0
    %v374 = vadd.f32 %v285, %v373
    %v375 = vpop.f32.mrb[0].mxu0
    %v376 = vpop.f32.mrb[0].mxu0
    %v377 = vadd.f32 %v288, %v376
    %v378 = vpop.f32.mrb[0].mxu0
    %379 = vdwg.mxu0
    %v380 = vld [vmem:[%s4 + $0x80] sm:$0xf]
    %v381 = vld [vmem:[%s4 + $0x84] sm:$0xf]
    %v382 = vld [vmem:[%s4 + $0x88] sm:$0xf]
    %v383 = vld [vmem:[%s4 + $0x8c] sm:$0xf]
    %v384 = vld [vmem:[%s4 + $0x90] sm:$0xf]
    %v385 = vld [vmem:[%s4 + $0x94] sm:$0xf]
    %v386 = vld [vmem:[%s4 + $0x98] sm:$0xf]
    %v387 = vld [vmem:[%s4 + $0x9c] sm:$0xf]
    %v388 = vld [vmem:[%s4 + $0xa0] sm:$0xf]
    %v389 = vld [vmem:[%s4 + $0xa4] sm:$0xf]
    %v390 = vld [vmem:[%s4 + $0xa8] sm:$0xf]
    %v391 = vld [vmem:[%s4 + $0xac] sm:$0xf]
    %v392 = vld [vmem:[%s4 + $0xb0] sm:$0xf]
    %v393 = vld [vmem:[%s4 + $0xb4] sm:$0xf]
    %v394 = vld [vmem:[%s4 + $0xb8] sm:$0xf]
    %v395 = vld [vmem:[%s4 + $0xbc] sm:$0xf]
    %v396 = vpack.c.bf16 %v116, %v113
    %v413 = vunpack.c.l.b16 %v380
    %v414 = vunpack.c.l.b16 %v381
    %v415 = vunpack.c.l.b16 %v382
    %v416 = vunpack.c.l.b16 %v383
    %v417 = vunpack.c.l.b16 %v384
    %v418 = vunpack.c.l.b16 %v385
    %v419 = vunpack.c.l.b16 %v386
    %v420 = vunpack.c.l.b16 %v387
    %v421 = vunpack.c.l.b16 %v388
    %v422 = vunpack.c.l.b16 %v389
    %v423 = vunpack.c.l.b16 %v390
    %v424 = vunpack.c.l.b16 %v391
    %v425 = vunpack.c.l.b16 %v392
    %v426 = vunpack.c.l.b16 %v393
    %v427 = vunpack.c.l.b16 %v394
    %v428 = vunpack.c.l.b16 %v395
    %v429 = vpack.c.b16 %v414, %v413
    %v430 = vpack.c.b16 %v416, %v415
    %v431 = vpack.c.b16 %v418, %v417
    %v432 = vpack.c.b16 %v420, %v419
    %v433 = vpack.c.b16 %v422, %v421
    %v434 = vpack.c.b16 %v424, %v423
    %v435 = vpack.c.b16 %v426, %v425
    %v436 = vpack.c.b16 %v428, %v427
    %445 = vmatprep.subr.bf16.mxu0 0
    %446 = vmatpush1.bf16.msra.mxu0 %v429
    %447 = vmatprep.subr.bf16.mxu0 0
    %448 = vmatpush1.bf16.msra.mxu0 %v430
    %449 = vmatprep.subr.bf16.mxu0 0
    %450 = vmatpush1.bf16.msra.mxu0 %v431
    %451 = vmatprep.subr.bf16.mxu0 0
    %452 = vmatpush1.bf16.msra.mxu0 %v432
    %453 = vmatprep.subr.bf16.mxu0 0
    %454 = vmatpush1.bf16.msra.mxu0 %v433
    %455 = vmatprep.subr.bf16.mxu0 0
    %456 = vmatpush1.bf16.msra.mxu0 %v434
    %457 = vmatprep.subr.bf16.mxu0 0
    %458 = vmatpush1.bf16.msra.mxu0 %v435
    %459 = vmatprep.subr.bf16.mxu0 0
    %460 = vmatpush1.bf16.msra.mxu0 %v436
    %461 = vmatprep.subr.bf16.mxu0 0
    %462 = vmatpush1.bf16.msra.mxu0 0
    %463 = vmatprep.subr.bf16.mxu0 0
    %464 = vmatpush1.bf16.msra.mxu0 0
    %465 = vmatprep.subr.bf16.mxu0 0
    %466 = vmatpush1.bf16.msra.mxu0 0
    %467 = vmatprep.subr.bf16.mxu0 0
    %468 = vmatpush1.bf16.msra.mxu0 0
    %469 = vmatprep.subr.bf16.mxu0 0
    %470 = vmatpush1.bf16.msra.mxu0 0
    %471 = vmatprep.subr.bf16.mxu0 0
    %472 = vmatpush1.bf16.msra.mxu0 0
    %473 = vmatprep.subr.bf16.mxu0 0
    %474 = vmatpush1.bf16.msra.mxu0 0
    %475 = vmatprep.subr.bf16.mxu0 0
    %476 = vmatpush1.bf16.msra.mxu0 0
    %477 = vmatprep.mubr.bf16.mxu0 0
    %478 = vmatmul.mubr.bf16.gmra.mrb[0].mxu0 %v396
    %v479 = vpop.f32.mrb[0].mxu0
    %v480 = vadd.f32 0.0, %v479
    %v481 = vpop.f32.mrb[0].mxu0
    %v482 = vpop.f32.mrb[0].mxu0
    %v483 = vadd.f32 0.0, %v482
    %v484 = vpop.f32.mrb[0].mxu0
    %485 = vdwg.mxu0
    %v486 = vadd.f32 %v374, %v480
    %v487 = vadd.f32 %v377, %v483
    %v488 = vld [vmem:[%s4 + $0xc0] sm:$0xf]
    %v489 = vld [vmem:[%s4 + $0xc4] sm:$0xf]
    %v490 = vld [vmem:[%s4 + $0xc8] sm:$0xf]
    %v491 = vld [vmem:[%s4 + $0xcc] sm:$0xf]
    %v492 = vld [vmem:[%s4 + $0xd0] sm:$0xf]
    %v493 = vld [vmem:[%s4 + $0xd4] sm:$0xf]
    %v494 = vld [vmem:[%s4 + $0xd8] sm:$0xf]
    %v495 = vld [vmem:[%s4 + $0xdc] sm:$0xf]
    %v496 = vld [vmem:[%s4 + $0xe0] sm:$0xf]
    %v497 = vld [vmem:[%s4 + $0xe4] sm:$0xf]
    %v498 = vld [vmem:[%s4 + $0xe8] sm:$0xf]
    %v499 = vld [vmem:[%s4 + $0xec] sm:$0xf]
    %v500 = vld [vmem:[%s4 + $0xf0] sm:$0xf]
    %v501 = vld [vmem:[%s4 + $0xf4] sm:$0xf]
    %v502 = vld [vmem:[%s4 + $0xf8] sm:$0xf]
    %v503 = vld [vmem:[%s4 + $0xfc] sm:$0xf]
    %v504 = vpack.c.bf16 %v120, %v119
    %v521 = vunpack.c.l.b16 %v488
    %v522 = vunpack.c.l.b16 %v489
    %v523 = vunpack.c.l.b16 %v490
    %v524 = vunpack.c.l.b16 %v491
    %v525 = vunpack.c.l.b16 %v492
    %v526 = vunpack.c.l.b16 %v493
    %v527 = vunpack.c.l.b16 %v494
    %v528 = vunpack.c.l.b16 %v495
    %v529 = vunpack.c.l.b16 %v496
    %v530 = vunpack.c.l.b16 %v497
    %v531 = vunpack.c.l.b16 %v498
    %v532 = vunpack.c.l.b16 %v499
    %v533 = vunpack.c.l.b16 %v500
    %v534 = vunpack.c.l.b16 %v501
    %v535 = vunpack.c.l.b16 %v502
    %v536 = vunpack.c.l.b16 %v503
    %v537 = vpack.c.b16 %v522, %v521
    %v538 = vpack.c.b16 %v524, %v523
    %v539 = vpack.c.b16 %v526, %v525
    %v540 = vpack.c.b16 %v528, %v527
    %v541 = vpack.c.b16 %v530, %v529
    %v542 = vpack.c.b16 %v532, %v531
    %v543 = vpack.c.b16 %v534, %v533
    %v544 = vpack.c.b16 %v536, %v535
    %553 = vmatprep.subr.bf16.mxu0 0
    %554 = vmatpush1.bf16.msra.mxu0 %v537
    %555 = vmatprep.subr.bf16.mxu0 0
    %556 = vmatpush1.bf16.msra.mxu0 %v538
    %557 = vmatprep.subr.bf16.mxu0 0
    %558 = vmatpush1.bf16.msra.mxu0 %v539
    %559 = vmatprep.subr.bf16.mxu0 0
    %560 = vmatpush1.bf16.msra.mxu0 %v540
    %561 = vmatprep.subr.bf16.mxu0 0
    %562 = vmatpush1.bf16.msra.mxu0 %v541
    %563 = vmatprep.subr.bf16.mxu0 0
    %564 = vmatpush1.bf16.msra.mxu0 %v542
    %565 = vmatprep.subr.bf16.mxu0 0
    %566 = vmatpush1.bf16.msra.mxu0 %v543
    %567 = vmatprep.subr.bf16.mxu0 0
    %568 = vmatpush1.bf16.msra.mxu0 %v544
    %569 = vmatprep.subr.bf16.mxu0 0
    %570 = vmatpush1.bf16.msra.mxu0 0
    %571 = vmatprep.subr.bf16.mxu0 0
    %572 = vmatpush1.bf16.msra.mxu0 0
    %573 = vmatprep.subr.bf16.mxu0 0
    %574 = vmatpush1.bf16.msra.mxu0 0
    %575 = vmatprep.subr.bf16.mxu0 0
    %576 = vmatpush1.bf16.msra.mxu0 0
    %577 = vmatprep.subr.bf16.mxu0 0
    %578 = vmatpush1.bf16.msra.mxu0 0
    %579 = vmatprep.subr.bf16.mxu0 0
    %580 = vmatpush1.bf16.msra.mxu0 0
    %581 = vmatprep.subr.bf16.mxu0 0
    %582 = vmatpush1.bf16.msra.mxu0 0
    %583 = vmatprep.subr.bf16.mxu0 0
    %584 = vmatpush1.bf16.msra.mxu0 0
    %585 = vmatprep.mubr.bf16.mxu0 0
    %586 = vmatmul.mubr.bf16.gmra.mrb[0].mxu0 %v504
    %v587 = vpop.f32.mrb[0].mxu0
    %v588 = vadd.f32 0.0, %v587
    %v589 = vpop.f32.mrb[0].mxu0
    %v590 = vpop.f32.mrb[0].mxu0
    %v591 = vadd.f32 0.0, %v590
    %v592 = vpop.f32.mrb[0].mxu0
    %593 = vdwg.mxu0
    %v594 = vadd.f32 %v486, %v588
    %v595 = vadd.f32 %v487, %v591
    %v596 = vld [vmem:[%s4 + $0x100] sm:$0xf]
    %v597 = vld [vmem:[%s4 + $0x104] sm:$0xf]
    %v598 = vld [vmem:[%s4 + $0x108] sm:$0xf]
    %v599 = vld [vmem:[%s4 + $0x10c] sm:$0xf]
    %v600 = vld [vmem:[%s4 + $0x110] sm:$0xf]
    %v601 = vld [vmem:[%s4 + $0x114] sm:$0xf]
    %v602 = vld [vmem:[%s4 + $0x118] sm:$0xf]
    %v603 = vld [vmem:[%s4 + $0x11c] sm:$0xf]
    %v604 = vld [vmem:[%s4 + $0x120] sm:$0xf]
    %v605 = vld [vmem:[%s4 + $0x124] sm:$0xf]
    %v606 = vld [vmem:[%s4 + $0x128] sm:$0xf]
    %v607 = vld [vmem:[%s4 + $0x12c] sm:$0xf]
    %v608 = vld [vmem:[%s4 + $0x130] sm:$0xf]
    %v609 = vld [vmem:[%s4 + $0x134] sm:$0xf]
    %v610 = vld [vmem:[%s4 + $0x138] sm:$0xf]
    %v611 = vld [vmem:[%s4 + $0x13c] sm:$0xf]
    %v612 = vpack.c.bf16 %v122, %v121
    %v629 = vunpack.c.l.b16 %v596
    %v630 = vunpack.c.l.b16 %v597
    %v631 = vunpack.c.l.b16 %v598
    %v632 = vunpack.c.l.b16 %v599
    %v633 = vunpack.c.l.b16 %v600
    %v634 = vunpack.c.l.b16 %v601
    %v635 = vunpack.c.l.b16 %v602
    %v636 = vunpack.c.l.b16 %v603
    %v637 = vunpack.c.l.b16 %v604
    %v638 = vunpack.c.l.b16 %v605
    %v639 = vunpack.c.l.b16 %v606
    %v640 = vunpack.c.l.b16 %v607
    %v641 = vunpack.c.l.b16 %v608
    %v642 = vunpack.c.l.b16 %v609
    %v643 = vunpack.c.l.b16 %v610
    %v644 = vunpack.c.l.b16 %v611
    %v645 = vpack.c.b16 %v630, %v629
    %v646 = vpack.c.b16 %v632, %v631
    %v647 = vpack.c.b16 %v634, %v633
    %v648 = vpack.c.b16 %v636, %v635
    %v649 = vpack.c.b16 %v638, %v637
    %v650 = vpack.c.b16 %v640, %v639
    %v651 = vpack.c.b16 %v642, %v641
    %v652 = vpack.c.b16 %v644, %v643
    %661 = vmatprep.subr.bf16.mxu0 0
    %662 = vmatpush1.bf16.msra.mxu0 %v645
    %663 = vmatprep.subr.bf16.mxu0 0
    %664 = vmatpush1.bf16.msra.mxu0 %v646
    %665 = vmatprep.subr.bf16.mxu0 0
    %666 = vmatpush1.bf16.msra.mxu0 %v647
    %667 = vmatprep.subr.bf16.mxu0 0
    %668 = vmatpush1.bf16.msra.mxu0 %v648
    %669 = vmatprep.subr.bf16.mxu0 0
    %670 = vmatpush1.bf16.msra.mxu0 %v649
    %671 = vmatprep.subr.bf16.mxu0 0
    %672 = vmatpush1.bf16.msra.mxu0 %v650
    %673 = vmatprep.subr.bf16.mxu0 0
    %674 = vmatpush1.bf16.msra.mxu0 %v651
    %675 = vmatprep.subr.bf16.mxu0 0
    %676 = vmatpush1.bf16.msra.mxu0 %v652
    %677 = vmatprep.subr.bf16.mxu0 0
    %678 = vmatpush1.bf16.msra.mxu0 0
    %679 = vmatprep.subr.bf16.mxu0 0
    %680 = vmatpush1.bf16.msra.mxu0 0
    %681 = vmatprep.subr.bf16.mxu0 0
    %682 = vmatpush1.bf16.msra.mxu0 0
    %683 = vmatprep.subr.bf16.mxu0 0
    %684 = vmatpush1.bf16.msra.mxu0 0
    %685 = vmatprep.subr.bf16.mxu0 0
    %686 = vmatpush1.bf16.msra.mxu0 0
    %687 = vmatprep.subr.bf16.mxu0 0
    %688 = vmatpush1.bf16.msra.mxu0 0
    %689 = vmatprep.subr.bf16.mxu0 0
    %690 = vmatpush1.bf16.msra.mxu0 0
    %691 = vmatprep.subr.bf16.mxu0 0
    %692 = vmatpush1.bf16.msra.mxu0 0
    %693 = vmatprep.mubr.bf16.mxu0 0
    %694 = vmatmul.mubr.bf16.gmra.mrb[0].mxu0 %v612
    %v695 = vpop.f32.mrb[0].mxu0
    %v696 = vadd.f32 0.0, %v695
    %v697 = vpop.f32.mrb[0].mxu0
    %v698 = vpop.f32.mrb[0].mxu0
    %v699 = vadd.f32 0.0, %v698
    %v700 = vpop.f32.mrb[0].mxu0
    %701 = vdwg.mxu0
    %v702 = vadd.f32 %v594, %v696
    %v703 = vadd.f32 %v595, %v699
    %v704 = vld [vmem:[%s5] sm:$0x1]
    %v705 = vlaneseq
    %v706 = vshrl.u32 %v705, 7
    %v707 = vsub.s32 0, %v706
    %v708 = vrot.slane %v704, %v707
    %v709 = vmul.f32 %v159, %v708
    %v710 = vmul.f32 %v160, %v708
    %v711 = vadd.f32 %v702, %v709
    %v712 = vadd.f32 %v703, %v710
    %v713 = vld [vmem:[%s5 + $0x1] sm:$0x1]
    %v714 = vlaneseq
    %v715 = vshrl.u32 %v714, 7
    %v716 = vsub.s32 0, %v715
    %v717 = vrot.slane %v713, %v716
    %v718 = vmul.f32 %v167, %v717
    %v719 = vmul.f32 %v168, %v717
    %v720 = vadd.f32 %v711, %v718
    %v721 = vadd.f32 %v712, %v719
    %v722 = vld [vmem:[%s6] sm:$0x1]
    %v724 = vlaneseq
    %v725 = vshrl.u32 %v724, 7
    %v726 = vsub.s32 0, %v725
    %v727 = vrot.slane %v722, %v726
    %v729 = vadd.f32 %v720, %v727
    %v730 = vadd.f32 %v721, %v727
    %v731 = vstv %s41
    %v732 = vmul.f32 %v729, %v731
    %v733 = vmul.f32 %v730, %v731
    %vm734 = vcmask 39936
    %v735 = vsel %vm734, %v732, -inf
    %v736 = vsel %vm734, %v733, -inf
    %v737 = vmax.f32 %v735, %v736
    %v738 = vrot.slane %v737, 4
    %v739 = vmax.f32 %v737, %v738
    %v740 = vrot.slane %v739, 2
    %v741 = vmax.f32 %v739, %v740
    %v742 = vrot.slane %v741, 1
    %v743 = vmax.f32 %v741, %v742
    %v744 = vsub.f32 %v732, %v743
    %v745 = vsub.f32 %v733, %v743
    %v746 = vmul.f32 %v744, 1.442695
    %v747 = vpow.pop %v746
    %v748 = vmul.f32 %v745, 1.442695
    %v749 = vpow.pop %v748
    %v750 = vsel %vm734, %v747, 0.0
    %v751 = vsel %vm734, %v749, 0.0
    %v752 = vadd.f32 %v750, %v751
    %v753 = vrot.slane %v752, 4
    %v754 = vadd.f32 %v752, %v753
    %v755 = vrot.slane %v754, 2
    %v756 = vadd.f32 %v754, %v755
    %v757 = vrot.slane %v756, 1
    %v758 = vadd.f32 %v756, %v757
    %v759 = vrcp.pop %v758
    %v760 = vmul.f32 %v747, %v759
    %v761 = vmul.f32 %v749, %v759
    %v762 = vadd.f32 %v760, 1e-11
    %v763 = vadd.f32 %v761, 1e-11
    %v764 = vsel %vm734, %v762, -inf
    %765 = vmax.xlane.f32.xlu0 %v764
    %v766 = vpop.xlane.xlu0 %765
    %v767 = vsel %vm734, %v763, -inf
    %768 = vmax.xlane.f32.xlu0 %v767
    %v769 = vpop.xlane.xlu0 %768
    %v770 = vmul.f32 %v46, %v46
    %v771 = vmul.f32 %v47, %v47
    %772 = vadd.xlane.f32.xlu0 %v770
    %v773 = vpop.xlane.xlu0 %772
    %774 = vadd.xlane.f32.xlu0 %v771
    %v775 = vpop.xlane.xlu0 %774
    %v776 = vmax.f32 %v773, 1e-16
    %v777 = vmax.f32 %v775, 1e-16
    %v778 = vrsqrt.pop %v776
    %v779 = vrsqrt.pop %v777
    %v780 = vmul.f32 %v46, %v778
    %v781 = vmul.f32 %v47, %v779
    %782 = vmatprep.subr.mxu0 0.0
    %783 = vmatpush1.xpose.msra.mxu0 %v780
    %784 = vmatprep.subr.mxu0 0.0
    %785 = vmatpush1.xpose.msra.mxu0 %v781
    %786 = vmatprep.subr.mxu0 0.0
    %787 = vmatpush1.xpose.msra.mxu0 0.0
    %788 = vmatprep.subr.mxu0 0.0
    %789 = vmatpush1.xpose.msra.mxu0 0.0
    %790 = vmatprep.subr.mxu0 0.0
    %791 = vmatpush1.xpose.msra.mxu0 0.0
    %792 = vmatprep.subr.mxu0 0.0
    %793 = vmatpush1.xpose.msra.mxu0 0.0
    %794 = vmatprep.subr.mxu0 0.0
    %795 = vmatpush1.xpose.msra.mxu0 0.0
    %796 = vmatprep.subr.mxu0 0.0
    %797 = vmatpush1.xpose.msra.mxu0 0.0
    %798 = vmatprep.subr.mxu0 0.0
    %799 = vmatpush1.xpose.msra.mxu0 0.0
    %800 = vmatprep.subr.mxu0 0.0
    %801 = vmatpush1.xpose.msra.mxu0 0.0
    %802 = vmatprep.subr.mxu0 0.0
    %803 = vmatpush1.xpose.msra.mxu0 0.0
    %804 = vmatprep.subr.mxu0 0.0
    %805 = vmatpush1.xpose.msra.mxu0 0.0
    %806 = vmatprep.subr.mxu0 0.0
    %807 = vmatpush1.xpose.msra.mxu0 0.0
    %808 = vmatprep.subr.mxu0 0.0
    %809 = vmatpush1.xpose.msra.mxu0 0.0
    %810 = vmatprep.subr.mxu0 0.0
    %811 = vmatpush1.xpose.msra.mxu0 0.0
    %812 = vmatprep.subr.mxu0 0.0
    %813 = vmatpush1.xpose.msra.mxu0 0.0
    %814 = vmatprep.subr.mxu0 0.0
    %815 = vmatpush1.xpose.msra.mxu0 0.0
    %816 = vmatprep.subr.mxu0 0.0
    %817 = vmatpush1.xpose.msra.mxu0 0.0
    %818 = vmatprep.subr.mxu0 0.0
    %819 = vmatpush1.xpose.msra.mxu0 0.0
    %820 = vmatprep.subr.mxu0 0.0
    %821 = vmatpush1.xpose.msra.mxu0 0.0
    %822 = vmatprep.subr.mxu0 0.0
    %823 = vmatpush1.xpose.msra.mxu0 0.0
    %824 = vmatprep.subr.mxu0 0.0
    %825 = vmatpush1.xpose.msra.mxu0 0.0
    %826 = vmatprep.subr.mxu0 0.0
    %827 = vmatpush1.xpose.msra.mxu0 0.0
    %828 = vmatprep.subr.mxu0 0.0
    %829 = vmatpush1.xpose.msra.mxu0 0.0
    %830 = vmatprep.subr.mxu0 0.0
    %831 = vmatpush1.xpose.msra.mxu0 0.0
    %832 = vmatprep.subr.mxu0 0.0
    %833 = vmatpush1.xpose.msra.mxu0 0.0
    %834 = vmatprep.subr.mxu0 0.0
    %835 = vmatpush1.xpose.msra.mxu0 0.0
    %836 = vmatprep.subr.mxu0 0.0
    %837 = vmatpush1.xpose.msra.mxu0 0.0
    %838 = vmatprep.subr.mxu0 0.0
    %839 = vmatpush1.xpose.msra.mxu0 0.0
    %840 = vmatprep.subr.mxu0 0.0
    %841 = vmatpush1.xpose.msra.mxu0 0.0
    %842 = vmatprep.subr.mxu0 0.0
    %843 = vmatpush1.xpose.msra.mxu0 0.0
    %844 = vmatprep.subr.mxu0 0.0
    %845 = vmatpush1.xpose.msra.mxu0 0.0
    %846 = vmatprep.mubr.f32.mxu0 0.0
    %847 = vmatmul.mubr.f32.gmra.mrb[0].mxu0 %v780
    %v848 = vpop.f32.mrb[0].mxu0
    %v849 = vadd.f32 0.0, %v848
    %v850 = vpop.f32.mrb[0].mxu0
    %851 = vmatprep.mubr.f32.mxu0 0.0
    %852 = vmatmul.mubr.f32.gmra.mrb[0].mxu0 %v781
    %v853 = vpop.f32.mrb[0].mxu0
    %v854 = vadd.f32 0.0, %v853
    %v855 = vpop.f32.mrb[0].mxu0
    %856 = vdwg.mxu0
    %v857 = vlaneseq
    %v858 = vshrl.u32 %v857, 7
    %v859 = vadd.s32 %v858, 8
    %v860 = vlaneseq
    %v861 = vand.u32 %v860, 127
    %vm862 = vcmp.eq.s32.totalorder %v858, %v861
    %vm863 = vcmp.eq.s32.totalorder %v859, %v861
    %v864 = vsel %vm862, 0.0, %v849
    %v865 = vsel %vm863, 0.0, %v854
    %v866 = vsel %vm63, %v864, inf
    %v867 = vsel %vm63, %v865, inf
    %v868 = vmin.f32 %v866, %v867
    %869 = vmin.xlane.f32.xlu0 %v868
    %v870 = vpop.xlane.xlu0 %869
    %v871 = vrot.slane %v870, 4
    %v872 = vmin.f32 %v870, %v871
    %v873 = vrot.slane %v872, 2
    %v874 = vmin.f32 %v872, %v873
    %v875 = vrot.slane %v874, 1
    %v876 = vmin.f32 %v874, %v875
    %s877 = vtos %v876
    %v878 = vsel %vm63, %v864, -inf
    %v879 = vsel %vm63, %v865, -inf
    %v880 = vmax.f32 %v878, %v879
    %881 = vmax.xlane.f32.xlu0 %v880
    %v882 = vpop.xlane.xlu0 %881
    %v883 = vrot.slane %v882, 4
    %v884 = vmax.f32 %v882, %v883
    %v885 = vrot.slane %v884, 2
    %v886 = vmax.f32 %v884, %v885
    %v887 = vrot.slane %v886, 1
    %v888 = vmax.f32 %v886, %v887
    %s889 = vtos %v888
    %s890 = ssub.f32 %s889, %s877
    %s891 = smul.f32 %s42, %s890
    %s892 = sadd.f32 %s877, %s891
    %v893 = vstv %s892
    %vm894 = vcmp.gt.f32.partialorder %v864, %v893
    %vm895 = vcmp.gt.f32.partialorder %v865, %v893
    %vm896 = vcmp.gt.s32.totalorder %v861, %v858
    %vm897 = vcmp.gt.s32.totalorder %v861, %v859
    %vm898 = vmand %vm894, %vm896
    %vm899 = vmand %vm895, %vm897
    %v900 = vadd.f32 %v864, %v766
    %v901 = vadd.f32 %v865, %v769
    %v902 = vsel %vm898, %v900, 0.0
    %v903 = vsel %vm899, %v901, 0.0
    %v904 = vsel %vm63, %v902, 0.0
    %v905 = vsel %vm63, %v903, 0.0
    %v906 = vadd.f32 %v904, %v905
    %v907 = vrot.slane %v906, 4
    %v908 = vadd.f32 %v906, %v907
    %v909 = vrot.slane %v908, 2
    %v910 = vadd.f32 %v908, %v909
    %v911 = vrot.slane %v910, 1
    %v912 = vadd.f32 %v910, %v911
    %913 = vadd.xlane.f32.xlu0 %v904
    %v914 = vpop.xlane.xlu0 %913
    %915 = vadd.xlane.f32.xlu0 %v905
    %v916 = vpop.xlane.xlu0 %915
    %v917 = vstv %s43
    %v918 = vmul.f32 %v917, %v912
    %s919 = ssub.f32 1.0, %s43
    %v920 = vstv %s919
    %v921 = vmul.f32 %v920, %v914
    %v922 = vmul.f32 %v920, %v916
    %v925 = vlaneseq
    %v926 = vshrl.u32 %v925, 7
    %v927 = vsub.s32 %v861, %v926
    %v928 = vrot.slane %v921, %v927
    %v929 = vadd.s32 %v861, 4294967288
    %v930 = vlaneseq
    %v931 = vshrl.u32 %v930, 7
    %v932 = vsub.s32 %v929, %v931
    %v933 = vrot.slane %v922, %v932
    %vm934 = vcmask 130112
    %v935 = vsel %vm934, %v933, %v928
    %v937 = vadd.f32 %v918, %v935
    %v938 = vsel %vm63, %v937, 0.0
    %939 = vst [vmem:[#allocation5] sm:$0x1] %v938
    // Predicated region
    $region34: #{tpu_custom_call.1} parent=1 // pred_check
      _
    $region35: #{tpu_custom_call.1} parent=1 // pred_check_branch
      %941 = sbr.rel (0) target = $region37
    $region36: #{tpu_custom_call.1} parent=1 // pred_region
      %s943 = ssub.s32 16, 16
      %944 = vsyncadd [#allocation3], %s943
      %s946 = sshll.u32 [#allocation5], 4
      %s947 = int_to_ptr.vmem [resolvable:$true] %s946
      %949 = dma.vmem_to_hbm [thread:$0]  %s947, 16, %s7, [#allocation3]
    $region37: #{tpu_custom_call.1} parent=1 // pred_fallthru
      _
    // Predicated region
    $region38: #{tpu_custom_call.1} parent=1 // pred_check
      _
    $region39: #{tpu_custom_call.1} parent=1 // pred_check_branch
      %951 = sbr.rel (0) target = $region41
    $region40: #{tpu_custom_call.1} parent=1 // pred_region
      %952 = dma.done [#allocation3], 16
    $region41: #{tpu_custom_call.1} parent=1 // pred_fallthru
      _
    %953 = vsyncpa [#allocation3], 1
    %954 = vsyncpa [#allocation4], 1

</llo_original>
